<compile_context>
chip_gen: v6e
topology: v6e:2x2x1
jax: 0.10.0
libtpu: 0.0.40
codegen_flags: <defaults>
</compile_context>

<pallas_src>
import jax
import jax.numpy as jnp
from jax.experimental import pallas as pl
from jax.experimental.pallas import tpu as pltpu


def _sigmoid(z):
    # Exact sigmoid: exp lands on the EUP slot, divide is exact (kernel is
    # DMA-bound, so approximate reciprocal would gain nothing).
    return 1.0 / (1.0 + jnp.exp(-z))


def _mlp_kernel(x_ref, w1_ref, b1_ref, w2t_ref, b2_ref, out_ref):
    # Shapes (batch-on-lanes):
    #   x_ref  : [D_in,  TN]    w1_ref : [H1, D_in]   b1_ref : [H1, 1]
    #   w2t_ref: [H1, D_out]    b2_ref : [D_out, 1]   out_ref: [D_out, TN]
    d_in = x_ref.shape[0]
    d_out = out_ref.shape[0]

    # ---- Layer 1: z1[j, n] = b1[j] + sum_k W1[j, k] * x[k, n]  (VPU MACs) ----
    z1 = b1_ref[...] + w1_ref[:, 0:1] * x_ref[0:1, :]          # [H1, TN]
    for k in range(1, d_in):                                    # static unroll
        z1 = z1 + w1_ref[:, k:k + 1] * x_ref[k:k + 1, :]
    h = _sigmoid(z1)                                            # [H1, TN]

    # ---- Layer 2: z2[d, n] = b2[d] + sum_j W2[d, j] * h[j, n] (sublane XLU) --
    for d in range(d_out):                                      # static unroll
        z2 = jnp.sum(h * w2t_ref[:, d:d + 1], axis=0, keepdims=True)  # [1, TN]
        z2 = z2 + b2_ref[d:d + 1, :]
        out_ref[d:d + 1, :] = _sigmoid(z2)                      # direct row store


def _ceil_div(a, b):
    return -(-a // b)


def _round_up(n, m):
    return _ceil_div(n, m) * m


def classify_dnn_forward(x, w1, b1, w2, b2, *, block_cols=8192, min_grid=2):
    """Forward pass of ClassifyDnn.

    x : [N, D_in] float32
    w1: [H1, D_in]   (nn.Linear weight, PyTorch layout), b1: [H1]
    w2: [D_out, H1]  (nn.Linear weight, PyTorch layout), b2: [D_out]
    Returns [N, D_out].
    """
    x = x.astype(jnp.float32)
    N, D_in = x.shape
    H1 = w1.shape[0]
    D_out = w2.shape[0]

    # Lane-dense layout: features on sublanes, batch on lanes.
    xt = jnp.transpose(x)                                # [D_in, N]
    w1 = w1.astype(jnp.float32)                          # [H1, D_in]
    w2t = jnp.transpose(w2).astype(jnp.float32)          # [H1, D_out]
    b1c = b1.astype(jnp.float32).reshape(H1, 1)
    b2c = b2.astype(jnp.float32).reshape(D_out, 1)

    # Batch tile: multiple of 128 lanes, capped at block_cols.  No padding of
    # x and no output slice — the last (possibly partial) block's OOB lanes
    # compute garbage that is never written back.
    tn = min(block_cols, _round_up(N, 128))
    if _ceil_div(N, tn) < min_grid:                      # keep both v7x TCs busy
        tn = max(128, _round_up(_ceil_div(N, min_grid), 128))
    grid = _ceil_div(N, tn)

    out_t = pl.pallas_call(
        _mlp_kernel,
        out_shape=jax.ShapeDtypeStruct((D_out, N), jnp.float32),
        grid=(grid,),
        in_specs=[
            pl.BlockSpec((D_in, tn), lambda i: (0, i)),    # streamed, lane-dense
            pl.BlockSpec((H1, D_in), lambda i: (0, 0)),    # VMEM-resident
            pl.BlockSpec((H1, 1), lambda i: (0, 0)),       # VMEM-resident
            pl.BlockSpec((H1, D_out), lambda i: (0, 0)),   # VMEM-resident
            pl.BlockSpec((D_out, 1), lambda i: (0, 0)),    # VMEM-resident
        ],
        out_specs=pl.BlockSpec((D_out, tn), lambda i: (0, i)),
        compiler_params=pltpu.CompilerParams(
            dimension_semantics=("parallel",),             # 2 TCs on v7x
        ),
    )(xt, w1, b1c, w2t, b2c)

    return jnp.transpose(out_t)                            # [N, D_out]


def _init_linear(key, in_features, out_features):
    """nn.Linear-style init: U(-1/sqrt(fan_in), 1/sqrt(fan_in)).
    Weight returned in PyTorch layout [out_features, in_features], plus bias."""
    kw, kb = jax.random.split(key)
    bound = 1.0 / jnp.sqrt(float(in_features))
    w = jax.random.uniform(kw, (out_features, in_features), jnp.float32,
                           minval=-bound, maxval=bound)
    b = jax.random.uniform(kb, (out_features,), jnp.float32,
                           minval=-bound, maxval=bound)
    return w, b


def _reference(x, w1, b1, w2, b2):
    h = jax.nn.sigmoid(x @ w1.T + b1)
    return jax.nn.sigmoid(h @ w2.T + b2)


if __name__ == "__main__":
    # Module-consistent shapes: 2-D-point binary classifier (D_in=2 -> H1=32 -> 1).
    input_size = 2
    H1 = 32
    output_size = 1

    key = jax.random.PRNGKey(0)
    kx1, kx2, k1, k2 = jax.random.split(key, 4)

    w1, b1 = _init_linear(k1, input_size, H1)       # [32, 2], [32]
    w2, b2 = _init_linear(k2, H1, output_size)      # [1, 32], [1]

    # Case 1: batched inference; tn shrinks to 256 so the grid has 2 steps.
    x_big = jax.random.normal(kx1, (512, input_size), jnp.float32)
    out_big = jax.block_until_ready(classify_dnn_forward(x_big, w1, b1, w2, b2))
    ref_big = _reference(x_big, w1, b1, w2, b2)
    assert out_big.shape == (512, output_size)
    assert jnp.allclose(out_big, ref_big, atol=1e-5, rtol=1e-5)

    # Case 2: tiny ragged batch (exercises the partial-final-block path,
    # no padding / slicing in HBM).
    x_small = jax.random.normal(kx2, (13, input_size), jnp.float32)
    out_small = jax.block_until_ready(classify_dnn_forward(x_small, w1, b1, w2, b2))
    ref_small = _reference(x_small, w1, b1, w2, b2)
    assert out_small.shape == (13, output_size)
    assert jnp.allclose(out_small, ref_small, atol=1e-5, rtol=1e-5)

    print("KERNEL_OK")
</pallas_src>

<mosaic_0001>
module attributes {stable_mosaic.version = 11 : i64} {
  func.func @_mlp_kernel(%arg0: i32, %arg1: memref<2x256xf32, #tpu.memory_space<vmem>>, %arg2: memref<32x2xf32, #tpu.memory_space<vmem>>, %arg3: memref<32x1xf32, #tpu.memory_space<vmem>>, %arg4: memref<32x1xf32, #tpu.memory_space<vmem>>, %arg5: memref<1x1xf32, #tpu.memory_space<vmem>>, %arg6: memref<1x256xf32, #tpu.memory_space<vmem>>) attributes {dimension_semantics = [#tpu.dimension_semantics<parallel>], iteration_bounds = array<i64: 2>, scalar_prefetch = 0 : i64, scratch_operands = 0 : i64, tpu.core_type = #tpu.core_type<tc>, window_params = [{transform_indices = @transform_0, window_bounds = array<i64: 2, 256>}, {pipeline_mode = #tpu.pipeline_mode<synchronous>, transform_indices = @transform_1, window_bounds = array<i64: 32, 2>}, {pipeline_mode = #tpu.pipeline_mode<synchronous>, transform_indices = @transform_2, window_bounds = array<i64: 32, 1>}, {pipeline_mode = #tpu.pipeline_mode<synchronous>, transform_indices = @transform_3, window_bounds = array<i64: 32, 1>}, {pipeline_mode = #tpu.pipeline_mode<synchronous>, transform_indices = @transform_4, window_bounds = array<i64: 1, 1>}, {transform_indices = @transform_5, window_bounds = array<i64: 1, 256>}]} {
    %c0 = arith.constant 0 : index
    %c0_0 = arith.constant 0 : index
    %0 = vector.load %arg3[%c0, %c0_0] : memref<32x1xf32, #tpu.memory_space<vmem>>, vector<32x1xf32>
    %c0_1 = arith.constant 0 : index
    %c0_2 = arith.constant 0 : index
    %1 = vector.load %arg2[%c0_1, %c0_2] : memref<32x2xf32, #tpu.memory_space<vmem>>, vector<32x1xf32>
    %c0_3 = arith.constant 0 : index
    %c0_4 = arith.constant 0 : index
    %2 = vector.load %arg1[%c0_3, %c0_4] : memref<2x256xf32, #tpu.memory_space<vmem>>, vector<1x256xf32>
    %3 = vector.broadcast %1 : vector<32x1xf32> to vector<32x256xf32>
    %4 = vector.broadcast %2 : vector<1x256xf32> to vector<32x256xf32>
    %5 = arith.mulf %3, %4 : vector<32x256xf32>
    %6 = vector.broadcast %0 : vector<32x1xf32> to vector<32x256xf32>
    %7 = arith.addf %6, %5 : vector<32x256xf32>
    %c0_5 = arith.constant 0 : index
    %c1 = arith.constant 1 : index
    %8 = vector.load %arg2[%c0_5, %c1] : memref<32x2xf32, #tpu.memory_space<vmem>>, vector<32x1xf32>
    %c1_6 = arith.constant 1 : index
    %c0_7 = arith.constant 0 : index
    %9 = vector.load %arg1[%c1_6, %c0_7] : memref<2x256xf32, #tpu.memory_space<vmem>>, vector<1x256xf32>
    %10 = vector.broadcast %8 : vector<32x1xf32> to vector<32x256xf32>
    %11 = vector.broadcast %9 : vector<1x256xf32> to vector<32x256xf32>
    %12 = arith.mulf %10, %11 : vector<32x256xf32>
    %13 = arith.addf %7, %12 : vector<32x256xf32>
    %cst = arith.constant 0.000000e+00 : f32
    %14 = vector.broadcast %cst : f32 to vector<32x256xf32>
    %15 = arith.subf %14, %13 : vector<32x256xf32>
    %16 = math.exp %15 : vector<32x256xf32>
    %cst_8 = arith.constant 1.000000e+00 : f32
    %17 = vector.broadcast %cst_8 : f32 to vector<32x256xf32>
    %18 = arith.addf %17, %16 : vector<32x256xf32>
    %cst_9 = arith.constant 1.000000e+00 : f32
    %19 = vector.broadcast %cst_9 : f32 to vector<32x256xf32>
    %20 = arith.divf %19, %18 : vector<32x256xf32>
    %c0_10 = arith.constant 0 : index
    %c0_11 = arith.constant 0 : index
    %21 = vector.load %arg4[%c0_10, %c0_11] : memref<32x1xf32, #tpu.memory_space<vmem>>, vector<32x1xf32>
    %22 = vector.broadcast %21 : vector<32x1xf32> to vector<32x256xf32>
    %23 = arith.mulf %20, %22 : vector<32x256xf32>
    %cst_12 = arith.constant dense<0.000000e+00> : vector<256xf32>
    %24 = vector.multi_reduction <add>, %23, %cst_12 [0] : vector<32x256xf32> to vector<256xf32>
    %25 = vector.shape_cast %24 : vector<256xf32> to vector<1x256xf32>
    %c0_13 = arith.constant 0 : index
    %c0_14 = arith.constant 0 : index
    %26 = vector.load %arg5[%c0_13, %c0_14] : memref<1x1xf32, #tpu.memory_space<vmem>>, vector<1x1xf32>
    %27 = vector.broadcast %26 : vector<1x1xf32> to vector<1x256xf32>
    %28 = arith.addf %25, %27 : vector<1x256xf32>
    %cst_15 = arith.constant 0.000000e+00 : f32
    %29 = vector.broadcast %cst_15 : f32 to vector<1x256xf32>
    %30 = arith.subf %29, %28 : vector<1x256xf32>
    %31 = math.exp %30 : vector<1x256xf32>
    %cst_16 = arith.constant 1.000000e+00 : f32
    %32 = vector.broadcast %cst_16 : f32 to vector<1x256xf32>
    %33 = arith.addf %32, %31 : vector<1x256xf32>
    %cst_17 = arith.constant 1.000000e+00 : f32
    %34 = vector.broadcast %cst_17 : f32 to vector<1x256xf32>
    %35 = arith.divf %34, %33 : vector<1x256xf32>
    %c0_18 = arith.constant 0 : index
    %c0_19 = arith.constant 0 : index
    %36 = vector.load %arg6[%c0_18, %c0_19] : memref<1x256xf32, #tpu.memory_space<vmem>>, vector<1x256xf32>
    tpu.vector_store %arg6[%c0_18, %c0_19], %35 {strides = array<i32>} : memref<1x256xf32, #tpu.memory_space<vmem>>, vector<1x256xf32>,
    return
  }
  func.func @transform_0(%arg0: i32) -> (i32, i32) {
    %c0_i32 = arith.constant 0 : i32
    %c0_i32_0 = arith.constant 0 : i32
    return %c0_i32, %arg0 : i32, i32
  }
  func.func @transform_1(%arg0: i32) -> (i32, i32) {
    %c0_i32 = arith.constant 0 : i32
    %c0_i32_0 = arith.constant 0 : i32
    %c0_i32_1 = arith.constant 0 : i32
    return %c0_i32, %c0_i32_0 : i32, i32
  }
  func.func @transform_2(%arg0: i32) -> (i32, i32) {
    %c0_i32 = arith.constant 0 : i32
    %c0_i32_0 = arith.constant 0 : i32
    %c0_i32_1 = arith.constant 0 : i32
    return %c0_i32, %c0_i32_0 : i32, i32
  }
  func.func @transform_3(%arg0: i32) -> (i32, i32) {
    %c0_i32 = arith.constant 0 : i32
    %c0_i32_0 = arith.constant 0 : i32
    %c0_i32_1 = arith.constant 0 : i32
    return %c0_i32, %c0_i32_0 : i32, i32
  }
  func.func @transform_4(%arg0: i32) -> (i32, i32) {
    %c0_i32 = arith.constant 0 : i32
    %c0_i32_0 = arith.constant 0 : i32
    %c0_i32_1 = arith.constant 0 : i32
    return %c0_i32, %c0_i32_0 : i32, i32
  }
  func.func @transform_5(%arg0: i32) -> (i32, i32) {
    %c0_i32 = arith.constant 0 : i32
    %c0_i32_0 = arith.constant 0 : i32
    return %c0_i32, %arg0 : i32, i32
  }
}

</mosaic_0001>

<llo_original>
// kernel: tpu_custom_call.1
$region0: #{tpu_custom_call.1}
  #allocation0 [shape = 'u32[]', space=smem, size = 0x4, offset = 0x4, fixed_abs, tag = 'smem constant byte address 0x4 - core index']
  #allocation1 [shape = 'u32[144,128]{1,0:T(1,128)}', space=vmem, size = 0x12000, scoped, tag = 'internal scratch']
  #allocation2 [shape = 'f32[1,1]{1,0:T(1,128)S(1)}', space=vmem, size = 0x200, scoped, tag = 'scoped memory for tpu_custom_call.1']
  %s0 = inlined_call_operand.vmem [shape: f32[2,512], index: 0, kind: input, shape index: {}]
  %s1 = inlined_call_operand.vmem [shape: f32[32,2], index: 1, kind: input, shape index: {}]
  %s2 = inlined_call_operand.vmem [shape: f32[32,1], index: 2, kind: input, shape index: {}]
  %s3 = inlined_call_operand.vmem [shape: f32[32,1], index: 3, kind: input, shape index: {}]
  %s4 = inlined_call_operand.<no memory space> [shape: f32[1,1], index: 4, kind: input, shape index: {}]
  %s5 = inlined_call_operand.hbm [shape: f32[1,512], index: 5, kind: output, shape index: {}]
  %s6 = sld [smem:[#allocation0]]
  $region53: #{tpu_custom_call.1} parent=0
    _
  %s8 = ssub.s32 1, %s6
  %s9 = scalar_select 0, %s8, %s6
  %v10 = vstv %s4
  %11 = vst [vmem:[#allocation2] sm:$0x1] %v10
  $region1: #{tpu_custom_call.1} parent=0
    #allocation3 [shape = 'u8[2048]{0}', space=vmem, size = 0x800, scoped, tag = 'output window, operand 0']
    #allocation4 [shape = 's32[2]{0}', space=sflag, size = 0x8, scoped, tag = 'scoped memory for tpu_custom_call.1']
    %12 = vsyncpa [#allocation4], 0
    %s13 = scalar_lea.sflag [#allocation4], 1
    %14 = vsyncpa %s13, 0
    loop: start=0, step=1, limit=4
    $region2: #{tpu_custom_call.1} parent=1 // loop_pre_header
      _
    $region3: #{tpu_custom_call.1} parent=1 // loop_header
      %s16 = sphi 0, %s20
      %p17 = scmp.ge.s32.totalorder %s16, 4
      %s26 = sphi 0, %s28
      %s29 = sphi 0, %s26
      %s30 = sphi 0, %s29
      %s46 = sphi 0, %s30
      %s50 = sphi 0, %s50
      %s52 = sphi 0, %s50
      %s53 = sphi 0, %s52
      %s67 = sphi 0, %s53
      %s71 = sphi 0, %s71
      %s73 = sphi 0, %s71
      %s74 = sphi 0, %s73
      %s88 = sphi 0, %s74
      %s92 = sphi 0, %s92
      %s94 = sphi 0, %s92
      %s95 = sphi 0, %s94
      %s109 = sphi 0, %s95
      %s113 = sphi 0, %s113
      %s115 = sphi 0, %s113
      %s116 = sphi 0, %s115
      %s130 = sphi 0, %s116
      %s136 = sphi 0, %s138
      %s139 = sphi 0, %s136
      %s140 = sphi 0, %s139
      %s156 = sphi 0, %s140
    $region4: #{tpu_custom_call.1} parent=1 // loop_header_branch
      %19 = sbr.rel (%p17) target = $region8
    $region5: #{tpu_custom_call.1} parent=1 // loop_body
      %s21 = ssub.s32 %s16, 1
      %s22 = ssub.s32 %s16, 2
      %s23 = sadd.s32 %s16, 1
      %s24 = ssub.s32 %s16, %s23
      %p25 = scmp.eq.s32.totalorder %s24, 0
      %s27 = sadd.s32 %s26, 1
      %s28 = scalar_select %p25, %s26, %s27
      %p31 = pneg %p25
      %p32 = scmp.eq.s32.totalorder %s16, 1
      %p33 = por %p31, %p32
      %p34 = scmp.ne.s32.totalorder %s26, %s29
      %p35 = scmp.eq.s32.totalorder %s16, 0
      %p36 = por %p34, %p35
      %p37 = scmp.ne.s32.totalorder %s26, %s29
      %p38 = scmp.eq.s32.totalorder %s21, 1
      %p39 = por %p37, %p38
      %p40 = scmp.ne.s32.totalorder %s29, %s30
      %p41 = scmp.eq.s32.totalorder %s21, 0
      %p42 = por %p40, %p41
      %p43 = scmp.ne.s32.totalorder %s29, %s30
      %p44 = scmp.eq.s32.totalorder %s22, 1
      %p45 = por %p43, %p44
      %p47 = scmp.ne.s32.totalorder %s30, %s46
      %p48 = scmp.eq.s32.totalorder %s22, 0
      %p49 = por %p47, %p48
      %s51 = sadd.s32 %s50, 1
      %p54 = scmp.eq.s32.totalorder %s16, 1
      %p55 = scmp.ne.s32.totalorder %s50, %s52
      %p56 = scmp.eq.s32.totalorder %s16, 0
      %p57 = por %p55, %p56
      %p58 = scmp.ne.s32.totalorder %s50, %s52
      %p59 = scmp.eq.s32.totalorder %s21, 1
      %p60 = por %p58, %p59
      %p61 = scmp.ne.s32.totalorder %s52, %s53
      %p62 = scmp.eq.s32.totalorder %s21, 0
      %p63 = por %p61, %p62
      %p64 = scmp.ne.s32.totalorder %s52, %s53
      %p65 = scmp.eq.s32.totalorder %s22, 1
      %p66 = por %p64, %p65
      %p68 = scmp.ne.s32.totalorder %s53, %s67
      %p69 = scmp.eq.s32.totalorder %s22, 0
      %p70 = por %p68, %p69
      %s72 = sadd.s32 %s71, 1
      %p75 = scmp.eq.s32.totalorder %s16, 1
      %p76 = scmp.ne.s32.totalorder %s71, %s73
      %p77 = scmp.eq.s32.totalorder %s16, 0
      %p78 = por %p76, %p77
      %p79 = scmp.ne.s32.totalorder %s71, %s73
      %p80 = scmp.eq.s32.totalorder %s21, 1
      %p81 = por %p79, %p80
      %p82 = scmp.ne.s32.totalorder %s73, %s74
      %p83 = scmp.eq.s32.totalorder %s21, 0
      %p84 = por %p82, %p83
      %p85 = scmp.ne.s32.totalorder %s73, %s74
      %p86 = scmp.eq.s32.totalorder %s22, 1
      %p87 = por %p85, %p86
      %p89 = scmp.ne.s32.totalorder %s74, %s88
      %p90 = scmp.eq.s32.totalorder %s22, 0
      %p91 = por %p89, %p90
      %s93 = sadd.s32 %s92, 1
      %p96 = scmp.eq.s32.totalorder %s16, 1
      %p97 = scmp.ne.s32.totalorder %s92, %s94
      %p98 = scmp.eq.s32.totalorder %s16, 0
      %p99 = por %p97, %p98
      %p100 = scmp.ne.s32.totalorder %s92, %s94
      %p101 = scmp.eq.s32.totalorder %s21, 1
      %p102 = por %p100, %p101
      %p103 = scmp.ne.s32.totalorder %s94, %s95
      %p104 = scmp.eq.s32.totalorder %s21, 0
      %p105 = por %p103, %p104
      %p106 = scmp.ne.s32.totalorder %s94, %s95
      %p107 = scmp.eq.s32.totalorder %s22, 1
      %p108 = por %p106, %p107
      %p110 = scmp.ne.s32.totalorder %s95, %s109
      %p111 = scmp.eq.s32.totalorder %s22, 0
      %p112 = por %p110, %p111
      %s114 = sadd.s32 %s113, 1
      %p117 = scmp.eq.s32.totalorder %s16, 1
      %p118 = scmp.ne.s32.totalorder %s113, %s115
      %p119 = scmp.eq.s32.totalorder %s16, 0
      %p120 = por %p118, %p119
      %p121 = scmp.ne.s32.totalorder %s113, %s115
      %p122 = scmp.eq.s32.totalorder %s21, 1
      %p123 = por %p121, %p122
      %p124 = scmp.ne.s32.totalorder %s115, %s116
      %p125 = scmp.eq.s32.totalorder %s21, 0
      %p126 = por %p124, %p125
      %p127 = scmp.ne.s32.totalorder %s115, %s116
      %p128 = scmp.eq.s32.totalorder %s22, 1
      %p129 = por %p127, %p128
      %p131 = scmp.ne.s32.totalorder %s116, %s130
      %p132 = scmp.eq.s32.totalorder %s22, 0
      %p133 = por %p131, %p132
      %s134 = ssub.s32 %s16, %s23
      %p135 = scmp.eq.s32.totalorder %s134, 0
      %s137 = sadd.s32 %s136, 1
      %s138 = scalar_select %p135, %s136, %s137
      %p141 = pneg %p135
      %p142 = scmp.eq.s32.totalorder %s16, 1
      %p143 = por %p141, %p142
      %p144 = scmp.ne.s32.totalorder %s136, %s139
      %p145 = scmp.eq.s32.totalorder %s16, 0
      %p146 = por %p144, %p145
      %p147 = scmp.ne.s32.totalorder %s136, %s139
      %p148 = scmp.eq.s32.totalorder %s21, 1
      %p149 = por %p147, %p148
      %p150 = scmp.ne.s32.totalorder %s139, %s140
      %p151 = scmp.eq.s32.totalorder %s21, 0
      %p152 = por %p150, %p151
      %p153 = scmp.ne.s32.totalorder %s139, %s140
      %p154 = scmp.eq.s32.totalorder %s22, 1
      %p155 = por %p153, %p154
      %p157 = scmp.ne.s32.totalorder %s140, %s156
      %p158 = scmp.eq.s32.totalorder %s22, 0
      %p159 = por %p157, %p158
      %p160 = scmp.le.s32.totalorder 1, %s16
      %p161 = scmp.lt.s32.totalorder %s16, 3
      %p162 = pnand %p160, %p161
      %p163 = pneg %p162
      // Predicated region
      $region9: #{tpu_custom_call.1} parent=5 // pred_check
        _
      $region10: #{tpu_custom_call.1} parent=5 // pred_check_branch
        %165 = sbr.rel (%p162) target = $region12
      $region11: #{tpu_custom_call.1} parent=5 // pred_region
        %s166 = ssub.s32 %s16, 1
        // Predicated region
        $region13: #{tpu_custom_call.1} parent=11 // pred_check
          %p167 = pneg %p63
        $region14: #{tpu_custom_call.1} parent=11 // pred_check_branch
          %169 = sbr.rel (%p167) target = $region16
        $region15: #{tpu_custom_call.1} parent=11 // pred_region
          _
        $region16: #{tpu_custom_call.1} parent=11 // pred_fallthru
          _
        // Predicated region
        $region17: #{tpu_custom_call.1} parent=11 // pred_check
          %p170 = pneg %p84
        $region18: #{tpu_custom_call.1} parent=11 // pred_check_branch
          %172 = sbr.rel (%p170) target = $region20
        $region19: #{tpu_custom_call.1} parent=11 // pred_region
          _
        $region20: #{tpu_custom_call.1} parent=11 // pred_fallthru
          _
        // Predicated region
        $region21: #{tpu_custom_call.1} parent=11 // pred_check
          %p173 = pneg %p105
        $region22: #{tpu_custom_call.1} parent=11 // pred_check_branch
          %175 = sbr.rel (%p173) target = $region24
        $region23: #{tpu_custom_call.1} parent=11 // pred_region
          _
        $region24: #{tpu_custom_call.1} parent=11 // pred_fallthru
          _
        // Predicated region
        $region25: #{tpu_custom_call.1} parent=11 // pred_check
          %p176 = pneg %p126
        $region26: #{tpu_custom_call.1} parent=11 // pred_check_branch
          %178 = sbr.rel (%p176) target = $region28
        $region27: #{tpu_custom_call.1} parent=11 // pred_region
          _
        $region28: #{tpu_custom_call.1} parent=11 // pred_fallthru
          _
      $region12: #{tpu_custom_call.1} parent=5 // pred_fallthru
        _
      %p179 = scmp.lt.s32.totalorder %s16, 2
      // Predicated region
      $region29: #{tpu_custom_call.1} parent=5 // pred_check
        %p180 = pneg %p179
      $region30: #{tpu_custom_call.1} parent=5 // pred_check_branch
        %182 = sbr.rel (%p180) target = $region32
      $region31: #{tpu_custom_call.1} parent=5 // pred_region
        // Predicated region
        $region33: #{tpu_custom_call.1} parent=31 // pred_check
          %p183 = pneg %p36
        $region34: #{tpu_custom_call.1} parent=31 // pred_check_branch
          %185 = sbr.rel (%p183) target = $region36
        $region35: #{tpu_custom_call.1} parent=31 // pred_region
          %s186 = smul.u32 2, %s16
          %p187 = scmp.lt.s32.totalorder %s186, 3
          %s188 = scalar_select %p187, %s186, 3
          %s189 = smul.addr %s188, 2
          %s190 = scalar_lea.vmem %s0, %s189
          %s191 = smul.u32 2, %s16
        $region36: #{tpu_custom_call.1} parent=31 // pred_fallthru
          _
      $region32: #{tpu_custom_call.1} parent=5 // pred_fallthru
        _
      %p192 = scmp.le.s32.totalorder 1, %s16
      %p193 = scmp.lt.s32.totalorder %s16, 3
      %p194 = pnand %p192, %p193
      %p195 = pneg %p194
      // Predicated region
      $region37: #{tpu_custom_call.1} parent=5 // pred_check
        _
      $region38: #{tpu_custom_call.1} parent=5 // pred_check_branch
        %197 = sbr.rel (%p194) target = $region40
      $region39: #{tpu_custom_call.1} parent=5 // pred_region
        %s198 = ssub.s32 %s16, 1
        %s199 = smul.u32 2, %s21
        %p200 = scmp.lt.s32.totalorder %s199, 3
        %s201 = scalar_select %p200, %s199, 3
        %s202 = smul.addr %s201, 2
        %s203 = scalar_lea.vmem %s0, %s202
        %p204 = pneg %p42
        %p205 = pneg %p39
        %p206 = pneg %p63
        %p207 = pneg %p60
        %p208 = pneg %p84
        %p209 = pneg %p81
        %p210 = pneg %p105
        %p211 = pneg %p102
        %p212 = pneg %p126
        %p213 = pneg %p123
        %p214 = pneg %p152
        %p215 = pneg %p149
        %s216 = sand.u32 %s139, 1
        %s217 = scalar_lea.sflag [#allocation4], %s216
        %s218 = sand.u32 %s139, 1
        %s219 = smul.addr %s218, 2
        %s220 = scalar_lea.vmem [#allocation3], %s219
        %s221 = smul.u32 2, %s21
        %p222 = scmp.lt.s32.totalorder %s221, 3
        %s223 = scalar_select %p222, %s221, 3
        %s224 = smul.addr %s223, 2
        %s225 = scalar_lea.vmem %s0, %s224
        %s226 = smul.u32 2, %s21
        %s227 = smul.u32 2, %s21
        %v228 = vld [vmem:[%s2] sm:$0xff]
        %v229 = vld [vmem:[%s2 + $0x8] sm:$0xff]
        %v230 = vld [vmem:[%s2 + $0x10] sm:$0xff]
        %v231 = vld [vmem:[%s2 + $0x18] sm:$0xff]
        %v232 = vld [vmem:[%s1] sm:$0xff]
        %v233 = vld [vmem:[%s1 + $0x8] sm:$0xff]
        %v234 = vld [vmem:[%s1 + $0x10] sm:$0xff]
        %v235 = vld [vmem:[%s1 + $0x18] sm:$0xff]
        %v236 = vld [vmem:[%s225] ss:$2 sm:$0x3]
        %238 = vset.pattern.permute.xlu0 0
        %239 = vperm.xlu0 %238, %v232
        %v240 = vpop.permute.xlu0 %239
        %243 = vset.pattern.permute.xlu0 0
        %244 = vperm.xlu0 %243, %v233
        %v245 = vpop.permute.xlu0 %244
        %248 = vset.pattern.permute.xlu0 0
        %249 = vperm.xlu0 %248, %v234
        %v250 = vpop.permute.xlu0 %249
        %253 = vset.pattern.permute.xlu0 0
        %254 = vperm.xlu0 %253, %v235
        %v255 = vpop.permute.xlu0 %254
        %v258 = vlaneseq
        %v259 = vshrl.u32 %v258, 7
        %v260 = vsub.s32 0, %v259
        %v261 = vrot.slane %v236, %v260
        %v262 = vlaneseq
        %v263 = vshrl.u32 %v262, 7
        %v264 = vsub.s32 1, %v263
        %v265 = vrot.slane %v236, %v264
        %v268 = vmul.f32 %v240, %v261
        %v269 = vmul.f32 %v240, %v265
        %v270 = vmul.f32 %v245, %v261
        %v271 = vmul.f32 %v245, %v265
        %v272 = vmul.f32 %v250, %v261
        %v273 = vmul.f32 %v250, %v265
        %v274 = vmul.f32 %v255, %v261
        %v275 = vmul.f32 %v255, %v265
        %277 = vset.pattern.permute.xlu0 0
        %278 = vperm.xlu0 %277, %v228
        %v279 = vpop.permute.xlu0 %278
        %282 = vset.pattern.permute.xlu0 0
        %283 = vperm.xlu0 %282, %v229
        %v284 = vpop.permute.xlu0 %283
        %287 = vset.pattern.permute.xlu0 0
        %288 = vperm.xlu0 %287, %v230
        %v289 = vpop.permute.xlu0 %288
        %292 = vset.pattern.permute.xlu0 0
        %293 = vperm.xlu0 %292, %v231
        %v294 = vpop.permute.xlu0 %293
        %v296 = vadd.f32 %v279, %v268
        %v297 = vadd.f32 %v279, %v269
        %v298 = vadd.f32 %v284, %v270
        %v299 = vadd.f32 %v284, %v271
        %v300 = vadd.f32 %v289, %v272
        %v301 = vadd.f32 %v289, %v273
        %v302 = vadd.f32 %v294, %v274
        %v303 = vadd.f32 %v294, %v275
        %s304 = scalar_lea.vmem %s225, 1
        %v305 = vld [vmem:[%s304] ss:$2 sm:$0x3]
        %306 = vset.pattern.permute.xlu0 1
        %307 = vperm.xlu0 %306, %v232
        %v308 = vpop.permute.xlu0 %307
        %310 = vset.pattern.permute.xlu0 1
        %311 = vperm.xlu0 %310, %v233
        %v312 = vpop.permute.xlu0 %311
        %314 = vset.pattern.permute.xlu0 1
        %315 = vperm.xlu0 %314, %v234
        %v316 = vpop.permute.xlu0 %315
        %318 = vset.pattern.permute.xlu0 1
        %319 = vperm.xlu0 %318, %v235
        %v320 = vpop.permute.xlu0 %319
        %v323 = vlaneseq
        %v324 = vshrl.u32 %v323, 7
        %v325 = vsub.s32 0, %v324
        %v326 = vrot.slane %v305, %v325
        %v327 = vlaneseq
        %v328 = vshrl.u32 %v327, 7
        %v329 = vsub.s32 1, %v328
        %v330 = vrot.slane %v305, %v329
        %v333 = vmul.f32 %v308, %v326
        %v334 = vmul.f32 %v308, %v330
        %v335 = vmul.f32 %v312, %v326
        %v336 = vmul.f32 %v312, %v330
        %v337 = vmul.f32 %v316, %v326
        %v338 = vmul.f32 %v316, %v330
        %v339 = vmul.f32 %v320, %v326
        %v340 = vmul.f32 %v320, %v330
        %v341 = vadd.f32 %v296, %v333
        %v342 = vadd.f32 %v297, %v334
        %v343 = vadd.f32 %v298, %v335
        %v344 = vadd.f32 %v299, %v336
        %v345 = vadd.f32 %v300, %v337
        %v346 = vadd.f32 %v301, %v338
        %v347 = vadd.f32 %v302, %v339
        %v348 = vadd.f32 %v303, %v340
        %v349 = vsub.f32 0.0, %v341
        %v350 = vsub.f32 0.0, %v342
        %v351 = vsub.f32 0.0, %v343
        %v352 = vsub.f32 0.0, %v344
        %v353 = vsub.f32 0.0, %v345
        %v354 = vsub.f32 0.0, %v346
        %v355 = vsub.f32 0.0, %v347
        %v356 = vsub.f32 0.0, %v348
        %v357 = vmul.f32 %v349, 1.442695
        %v358 = vpow.pop %v357
        %v359 = vmul.f32 %v350, 1.442695
        %v360 = vpow.pop %v359
        %v361 = vmul.f32 %v351, 1.442695
        %v362 = vpow.pop %v361
        %v363 = vmul.f32 %v352, 1.442695
        %v364 = vpow.pop %v363
        %v365 = vmul.f32 %v353, 1.442695
        %v366 = vpow.pop %v365
        %v367 = vmul.f32 %v354, 1.442695
        %v368 = vpow.pop %v367
        %v369 = vmul.f32 %v355, 1.442695
        %v370 = vpow.pop %v369
        %v371 = vmul.f32 %v356, 1.442695
        %v372 = vpow.pop %v371
        %v373 = vadd.f32 %v358, 1.0
        %v374 = vadd.f32 %v360, 1.0
        %v375 = vadd.f32 %v362, 1.0
        %v376 = vadd.f32 %v364, 1.0
        %v377 = vadd.f32 %v366, 1.0
        %v378 = vadd.f32 %v368, 1.0
        %v379 = vadd.f32 %v370, 1.0
        %v380 = vadd.f32 %v372, 1.0
        %v381 = vrcp.pop %v373
        %v382 = vmul.f32 1.0, %v381
        %v383 = vrcp.pop %v374
        %v384 = vmul.f32 1.0, %v383
        %v385 = vrcp.pop %v375
        %v386 = vmul.f32 1.0, %v385
        %v387 = vrcp.pop %v376
        %v388 = vmul.f32 1.0, %v387
        %v389 = vrcp.pop %v377
        %v390 = vmul.f32 1.0, %v389
        %v391 = vrcp.pop %v378
        %v392 = vmul.f32 1.0, %v391
        %v393 = vrcp.pop %v379
        %v394 = vmul.f32 1.0, %v393
        %v395 = vrcp.pop %v380
        %v396 = vmul.f32 1.0, %v395
        %v397 = vld [vmem:[%s3] sm:$0xff]
        %v398 = vld [vmem:[%s3 + $0x8] sm:$0xff]
        %v399 = vld [vmem:[%s3 + $0x10] sm:$0xff]
        %v400 = vld [vmem:[%s3 + $0x18] sm:$0xff]
        %402 = vset.pattern.permute.xlu0 0
        %403 = vperm.xlu0 %402, %v397
        %v404 = vpop.permute.xlu0 %403
        %407 = vset.pattern.permute.xlu0 0
        %408 = vperm.xlu0 %407, %v398
        %v409 = vpop.permute.xlu0 %408
        %412 = vset.pattern.permute.xlu0 0
        %413 = vperm.xlu0 %412, %v399
        %v414 = vpop.permute.xlu0 %413
        %417 = vset.pattern.permute.xlu0 0
        %418 = vperm.xlu0 %417, %v400
        %v419 = vpop.permute.xlu0 %418
        %v421 = vmul.f32 %v382, %v404
        %v422 = vmul.f32 %v384, %v404
        %v423 = vmul.f32 %v386, %v409
        %v424 = vmul.f32 %v388, %v409
        %v425 = vmul.f32 %v390, %v414
        %v426 = vmul.f32 %v392, %v414
        %v427 = vmul.f32 %v394, %v419
        %v428 = vmul.f32 %v396, %v419
        %v429 = vadd.f32 %v421, %v423
        %v430 = vadd.f32 %v429, %v425
        %v431 = vadd.f32 %v430, %v427
        %v432 = vrot.slane %v431, 4
        %v433 = vadd.f32 %v431, %v432
        %v434 = vrot.slane %v433, 2
        %v435 = vadd.f32 %v433, %v434
        %v436 = vrot.slane %v435, 1
        %v437 = vadd.f32 %v435, %v436
        %v438 = vadd.f32 %v422, %v424
        %v439 = vadd.f32 %v438, %v426
        %v440 = vadd.f32 %v439, %v428
        %v441 = vrot.slane %v440, 4
        %v442 = vadd.f32 %v440, %v441
        %v443 = vrot.slane %v442, 2
        %v444 = vadd.f32 %v442, %v443
        %v445 = vrot.slane %v444, 1
        %v446 = vadd.f32 %v444, %v445
        %v447 = vld [vmem:[#allocation2] sm:$0x1]
        %449 = vset.pattern.permute.xlu0 0
        %450 = vperm.xlu0 %449, %v447
        %v451 = vpop.permute.xlu0 %450
        %v453 = vlaneseq
        %v454 = vshrl.u32 %v453, 7
        %v455 = vsub.s32 0, %v454
        %v456 = vrot.slane %v451, %v455
        %v457 = vadd.f32 %v437, %v456
        %v458 = vadd.f32 %v446, %v456
        %v459 = vsub.f32 0.0, %v457
        %v460 = vsub.f32 0.0, %v458
        %v461 = vmul.f32 %v459, 1.442695
        %v462 = vpow.pop %v461
        %v463 = vmul.f32 %v460, 1.442695
        %v464 = vpow.pop %v463
        %v465 = vadd.f32 %v462, 1.0
        %v466 = vadd.f32 %v464, 1.0
        %v467 = vrcp.pop %v465
        %v468 = vmul.f32 1.0, %v467
        %v469 = vrcp.pop %v466
        %v470 = vmul.f32 1.0, %v469
        %v473 = vcombine.low %v468, %v470
        %v475 = vunpack.c.l.s4 1966171168
        %v476 = vunpack.c.0.s8 %v475
        %v477 = vlaneseq
        %v478 = vshrl.u32 %v477, 7
        %v479 = vsub.s32 %v476, %v478
        %v480 = vrot.slane %v473, %v479
        %v482 = vunpack.c.l.s4 1966171168
        %v483 = vunpack.c.0.s8 %v482
        %v484 = vlaneseq
        %v485 = vshrl.u32 %v484, 7
        %v486 = vsub.s32 %v483, %v485
        %v487 = vrot.slane %v480, %v486
        %v489 = vlaneseq
        %vm490 = vcmp.ge.s32.totalorder %v489, 0
        %vm491 = vcmp.lt.s32.totalorder %v489, 256
        %vm492 = vmand %vm490, %vm491
        %493 = vst.msk [vmem:[%s220] sm:$0x3] %vm492, %v487
        %s494 = sand.u32 %s139, 1
        %s495 = scalar_lea.sflag [#allocation4], %s494
        %s496 = sand.u32 %s139, 1
        %s497 = smul.addr %s496, 2
        %s498 = scalar_lea.vmem [#allocation3], %s497
        // Predicated region
        $region41: #{tpu_custom_call.1} parent=39 // pred_check
          %p499 = pneg %p149
        $region42: #{tpu_custom_call.1} parent=39 // pred_check_branch
          %501 = sbr.rel (%p499) target = $region44
        $region43: #{tpu_custom_call.1} parent=39 // pred_region
          %s502 = smul.u32 2, %s21
          %s504 = ssub.s32 32, 32
          %505 = vsyncadd %s495, %s504
          %s506 = smul.addr %s502, 16
          %s507 = scalar_lea.hbm %s5, %s506
          %s509 = sshll.u32 %s498, 4
          %s510 = int_to_ptr.vmem [resolvable:$true] %s509
          %512 = dma.vmem_to_hbm [thread:$0]  %s510, 32, %s507, %s495
        $region44: #{tpu_custom_call.1} parent=39 // pred_fallthru
          _
      $region40: #{tpu_custom_call.1} parent=5 // pred_fallthru
        _
      %p513 = scmp.le.s32.totalorder 2, %s16
      // Predicated region
      $region45: #{tpu_custom_call.1} parent=5 // pred_check
        %p514 = pneg %p513
      $region46: #{tpu_custom_call.1} parent=5 // pred_check_branch
        %516 = sbr.rel (%p514) target = $region48
      $region47: #{tpu_custom_call.1} parent=5 // pred_region
        %s517 = ssub.s32 %s16, 2
        // Predicated region
        $region49: #{tpu_custom_call.1} parent=47 // pred_check
          %p518 = pneg %p155
        $region50: #{tpu_custom_call.1} parent=47 // pred_check_branch
          %520 = sbr.rel (%p518) target = $region52
        $region51: #{tpu_custom_call.1} parent=47 // pred_region
          %s521 = sand.u32 %s140, 1
          %s522 = scalar_lea.sflag [#allocation4], %s521
          %s523 = sand.u32 %s140, 1
          %s524 = smul.addr %s523, 2
          %s525 = scalar_lea.vmem [#allocation3], %s524
          %526 = dma.done %s522, 32
        $region52: #{tpu_custom_call.1} parent=47 // pred_fallthru
          _
      $region48: #{tpu_custom_call.1} parent=5 // pred_fallthru
        _
    $region6: #{tpu_custom_call.1} parent=1 // loop_footer
      %s20 = sadd.s32 1, %s16
    $region7: #{tpu_custom_call.1} parent=1 // loop_footer_branch
      %15 = sbr.rel target = $region3
    $region8: #{tpu_custom_call.1} parent=1 // loop_exit
      _
    %527 = vsyncpa [#allocation4], 1
    %s528 = scalar_lea.sflag [#allocation4], 1
    %529 = vsyncpa %s528, 1

</llo_original>
